<compile_context>
chip_gen: v7x
topology: tpu7x:2x2x1
jax: 0.10.0
libtpu: 0.0.40
codegen_flags: <defaults>
</compile_context>

<pallas_src>
import jax
import jax.numpy as jnp
from jax import lax
from jax.experimental import pallas as pl
from jax.experimental.pallas import tpu as pltpu

IN_F = 41
HID = 160
OUT_F = 1
LN_EPS = 1e-5          # torch.nn.LayerNorm default


def _round_up(x, m):
    return ((x + m - 1) // m) * m


def fnids_mlp_kernel(x_ref, w1_ref, b1_ref, g_ref, beta_ref, w2_ref, b2_ref,
                     o_ref):
    x = x_ref[...]                                     # (BT, 41) f32

    # fc1: (BT, 41) @ (41, 160) on the MXU, f32 accumulation.
    h = jnp.dot(x, w1_ref[...], preferred_element_type=jnp.float32)
    h = h + b1_ref[...]                                # (1, 160) broadcast

    # LayerNorm over the last dim (160); biased variance, eps inside rsqrt
    # (matches torch.nn.LayerNorm). Centered two-pass form for stability.
    mean = jnp.mean(h, axis=-1, keepdims=True)         # XLU lane reduce
    centered = h - mean
    var = jnp.mean(centered * centered, axis=-1, keepdims=True)
    inv = lax.rsqrt(var + LN_EPS)                      # EUP (free slot)

    # normalize + affine + ReLU fused in one expression.
    y = jnp.maximum(centered * inv * g_ref[...] + beta_ref[...], 0.0)

    # fc2 as a single column: VPU multiply by the (1,160) w2 row, lane-reduce,
    # add bias.  (BT, 1) result -> compact 4 B/row output stream.
    out = jnp.sum(y * w2_ref[...], axis=-1, keepdims=True) + b2_ref[...]

    o_ref[...] = out.astype(o_ref.dtype)


def fnids_mlp(x, w1, b1, gamma, beta, w2, b2, *, max_block=2048):
    """x: (B, 41) f32.  w1: (41,160), b1/gamma/beta: (*,160),
    w2: (160,1), b2: (1,1) -- all f32.  Returns (B, 1) f32."""
    B = x.shape[0]

    # Batch tile: small batches -> one right-sized block (multiple of 8);
    # large batches -> >= 4 grid steps (v7x megacore + pipelining) while
    # keeping >= 512 rows/step, capped at 2048 for VMEM headroom.
    if B <= 512:
        BT = _round_up(B, 8)
    else:
        BT = min(max_block, _round_up(pl.cdiv(B, 4), 512))
    grid = (pl.cdiv(B, BT),)

    # One-time wrapper-side parameter shaping (all tiny, all resident).
    w1_in = w1.astype(jnp.float32)                      # (41, 160)
    b1_in = b1.reshape(1, HID).astype(jnp.float32)
    g_in = gamma.reshape(1, HID).astype(jnp.float32)
    beta_in = beta.reshape(1, HID).astype(jnp.float32)
    w2_in = w2.reshape(1, HID).astype(jnp.float32)      # (160,1) -> (1,160) row
    b2_in = b2.reshape(1, OUT_F).astype(jnp.float32)    # (1, 1)

    const = lambda i: (0, 0)   # resident across the whole grid (no re-DMA)

    out = pl.pallas_call(
        fnids_mlp_kernel,
        out_shape=jax.ShapeDtypeStruct((B, OUT_F), jnp.float32),
        grid_spec=pltpu.PrefetchScalarGridSpec(
            num_scalar_prefetch=0,
            grid=grid,
            in_specs=[
                pl.BlockSpec((BT, IN_F), lambda i: (i, 0)),   # x  (streamed)
                pl.BlockSpec((IN_F, HID), const),             # w1 (resident)
                pl.BlockSpec((1, HID), const),                # b1
                pl.BlockSpec((1, HID), const),                # gamma
                pl.BlockSpec((1, HID), const),                # beta
                pl.BlockSpec((1, HID), const),                # w2 row
                pl.BlockSpec((1, OUT_F), const),              # b2
            ],
            out_specs=pl.BlockSpec((BT, OUT_F), lambda i: (i, 0)),
        ),
        compiler_params=pltpu.CompilerParams(
            dimension_semantics=("parallel",),   # v7x: shard batch over 2 TCs
        ),
    )(x.astype(jnp.float32), w1_in, b1_in, g_in, beta_in, w2_in, b2_in)

    return out


def reference(x, w1, b1, gamma, beta, w2, b2):
    h = x @ w1 + b1.reshape(1, HID)
    mean = jnp.mean(h, axis=-1, keepdims=True)
    var = jnp.mean((h - mean) ** 2, axis=-1, keepdims=True)
    h = (h - mean) / jnp.sqrt(var + LN_EPS)
    h = h * gamma.reshape(1, HID) + beta.reshape(1, HID)
    h = jnp.maximum(h, 0.0)
    return h @ w2 + b2.reshape(1, OUT_F)


if __name__ == "__main__":
    key = jax.random.PRNGKey(0)
    kx, k1, kb1, k2, kb2, kg, kbt = jax.random.split(key, 7)

    B = 8  # small batch
    x = jax.random.normal(kx, (B, IN_F), dtype=jnp.float32)

    # Deterministic synthetic params (uniform like torch's default init scale)
    bound1 = 1.0 / (IN_F ** 0.5)
    w1 = jax.random.uniform(k1, (IN_F, HID), jnp.float32, -bound1, bound1)
    b1 = jax.random.uniform(kb1, (1, HID), jnp.float32, -bound1, bound1)
    bound2 = 1.0 / (HID ** 0.5)
    w2 = jax.random.uniform(k2, (HID, OUT_F), jnp.float32, -bound2, bound2)
    b2 = jax.random.uniform(kb2, (1, OUT_F), jnp.float32, -bound2, bound2)
    # Non-trivial LayerNorm affine params to exercise the affine path.
    gamma = 1.0 + 0.1 * jax.random.normal(kg, (1, HID), dtype=jnp.float32)
    beta = 0.1 * jax.random.normal(kbt, (1, HID), dtype=jnp.float32)

    out = fnids_mlp(x, w1, b1, gamma, beta, w2, b2)
    out = jax.block_until_ready(out)

    ref = reference(x, w1, b1, gamma, beta, w2, b2)

    assert out.shape == (B, OUT_F), out.shape
    err = float(jnp.max(jnp.abs(out - ref)))
    # Tolerance allows for XLA-vs-Mosaic f32 matmul pass-count differences.
    assert jnp.allclose(out, ref, atol=1e-2, rtol=1e-2), err

    print("KERNEL_OK")
</pallas_src>

<mosaic_0001>
module attributes {stable_mosaic.version = 11 : i64} {
  func.func @fnids_mlp_kernel(%arg0: i32, %arg1: memref<8x41xf32, #tpu.memory_space<vmem>>, %arg2: memref<41x160xf32, #tpu.memory_space<vmem>>, %arg3: memref<1x160xf32, #tpu.memory_space<vmem>>, %arg4: memref<1x160xf32, #tpu.memory_space<vmem>>, %arg5: memref<1x160xf32, #tpu.memory_space<vmem>>, %arg6: memref<1x160xf32, #tpu.memory_space<vmem>>, %arg7: memref<1x1xf32, #tpu.memory_space<vmem>>, %arg8: memref<8x1xf32, #tpu.memory_space<vmem>>) attributes {dimension_semantics = [#tpu.dimension_semantics<parallel>], iteration_bounds = array<i64: 1>, scalar_prefetch = 0 : i64, scratch_operands = 0 : i64, tpu.core_type = #tpu.core_type<tc>, window_params = [{transform_indices = @transform_0, window_bounds = array<i64: 8, 41>}, {pipeline_mode = #tpu.pipeline_mode<synchronous>, transform_indices = @transform_1, window_bounds = array<i64: 41, 160>}, {pipeline_mode = #tpu.pipeline_mode<synchronous>, transform_indices = @transform_2, window_bounds = array<i64: 1, 160>}, {pipeline_mode = #tpu.pipeline_mode<synchronous>, transform_indices = @transform_3, window_bounds = array<i64: 1, 160>}, {pipeline_mode = #tpu.pipeline_mode<synchronous>, transform_indices = @transform_4, window_bounds = array<i64: 1, 160>}, {pipeline_mode = #tpu.pipeline_mode<synchronous>, transform_indices = @transform_5, window_bounds = array<i64: 1, 160>}, {pipeline_mode = #tpu.pipeline_mode<synchronous>, transform_indices = @transform_6, window_bounds = array<i64: 1, 1>}, {transform_indices = @transform_7, window_bounds = array<i64: 8, 1>}]} {
    %c0 = arith.constant 0 : index
    %c0_0 = arith.constant 0 : index
    %0 = vector.load %arg1[%c0, %c0_0] : memref<8x41xf32, #tpu.memory_space<vmem>>, vector<8x41xf32>
    %c0_1 = arith.constant 0 : index
    %c0_2 = arith.constant 0 : index
    %1 = vector.load %arg2[%c0_1, %c0_2] : memref<41x160xf32, #tpu.memory_space<vmem>>, vector<41x160xf32>
    %cst = arith.constant dense<0.000000e+00> : vector<8x160xf32>
    %2 = tpu.matmul %0, %1, %cst {dimension_numbers = #tpu.dot_dimension_numbers<[1], [0], [0], [1], [0, 0, 1, 1], [], []>} : vector<8x41xf32>, vector<41x160xf32>, vector<8x160xf32> -> vector<8x160xf32>
    %c0_3 = arith.constant 0 : index
    %c0_4 = arith.constant 0 : index
    %3 = vector.load %arg3[%c0_3, %c0_4] : memref<1x160xf32, #tpu.memory_space<vmem>>, vector<1x160xf32>
    %4 = vector.broadcast %3 : vector<1x160xf32> to vector<8x160xf32>
    %5 = arith.addf %2, %4 : vector<8x160xf32>
    %cst_5 = arith.constant dense<0.000000e+00> : vector<8xf32>
    %6 = vector.multi_reduction <add>, %5, %cst_5 [1] : vector<8x160xf32> to vector<8xf32>
    %7 = vector.shape_cast %6 : vector<8xf32> to vector<8x1xf32>
    %cst_6 = arith.constant 1.600000e+02 : f32
    %8 = vector.broadcast %cst_6 : f32 to vector<8x1xf32>
    %9 = arith.divf %7, %8 : vector<8x1xf32>
    %10 = vector.broadcast %9 : vector<8x1xf32> to vector<8x160xf32>
    %11 = arith.subf %5, %10 : vector<8x160xf32>
    %12 = arith.mulf %11, %11 : vector<8x160xf32>
    %cst_7 = arith.constant dense<0.000000e+00> : vector<8xf32>
    %13 = vector.multi_reduction <add>, %12, %cst_7 [1] : vector<8x160xf32> to vector<8xf32>
    %14 = vector.shape_cast %13 : vector<8xf32> to vector<8x1xf32>
    %cst_8 = arith.constant 1.600000e+02 : f32
    %15 = vector.broadcast %cst_8 : f32 to vector<8x1xf32>
    %16 = arith.divf %14, %15 : vector<8x1xf32>
    %cst_9 = arith.constant 9.99999974E-6 : f32
    %17 = vector.broadcast %cst_9 : f32 to vector<8x1xf32>
    %18 = arith.addf %16, %17 : vector<8x1xf32>
    %19 = math.rsqrt %18 : vector<8x1xf32>
    %20 = vector.broadcast %19 : vector<8x1xf32> to vector<8x160xf32>
    %21 = arith.mulf %11, %20 : vector<8x160xf32>
    %c0_10 = arith.constant 0 : index
    %c0_11 = arith.constant 0 : index
    %22 = vector.load %arg4[%c0_10, %c0_11] : memref<1x160xf32, #tpu.memory_space<vmem>>, vector<1x160xf32>
    %23 = vector.broadcast %22 : vector<1x160xf32> to vector<8x160xf32>
    %24 = arith.mulf %21, %23 : vector<8x160xf32>
    %c0_12 = arith.constant 0 : index
    %c0_13 = arith.constant 0 : index
    %25 = vector.load %arg5[%c0_12, %c0_13] : memref<1x160xf32, #tpu.memory_space<vmem>>, vector<1x160xf32>
    %26 = vector.broadcast %25 : vector<1x160xf32> to vector<8x160xf32>
    %27 = arith.addf %24, %26 : vector<8x160xf32>
    %cst_14 = arith.constant 0.000000e+00 : f32
    %28 = vector.broadcast %cst_14 : f32 to vector<8x160xf32>
    %29 = arith.maximumf %27, %28 : vector<8x160xf32>
    %c0_15 = arith.constant 0 : index
    %c0_16 = arith.constant 0 : index
    %30 = vector.load %arg6[%c0_15, %c0_16] : memref<1x160xf32, #tpu.memory_space<vmem>>, vector<1x160xf32>
    %31 = vector.broadcast %30 : vector<1x160xf32> to vector<8x160xf32>
    %32 = arith.mulf %29, %31 : vector<8x160xf32>
    %cst_17 = arith.constant dense<0.000000e+00> : vector<8xf32>
    %33 = vector.multi_reduction <add>, %32, %cst_17 [1] : vector<8x160xf32> to vector<8xf32>
    %34 = vector.shape_cast %33 : vector<8xf32> to vector<8x1xf32>
    %c0_18 = arith.constant 0 : index
    %c0_19 = arith.constant 0 : index
    %35 = vector.load %arg7[%c0_18, %c0_19] : memref<1x1xf32, #tpu.memory_space<vmem>>, vector<1x1xf32>
    %36 = vector.broadcast %35 : vector<1x1xf32> to vector<8x1xf32>
    %37 = arith.addf %34, %36 : vector<8x1xf32>
    %c0_20 = arith.constant 0 : index
    %c0_21 = arith.constant 0 : index
    %38 = vector.load %arg8[%c0_20, %c0_21] : memref<8x1xf32, #tpu.memory_space<vmem>>, vector<8x1xf32>
    tpu.vector_store %arg8[%c0_20, %c0_21], %37 {strides = array<i32>} : memref<8x1xf32, #tpu.memory_space<vmem>>, vector<8x1xf32>,
    return
  }
  func.func @transform_0(%arg0: i32) -> (i32, i32) {
    %c0_i32 = arith.constant 0 : i32
    %c0_i32_0 = arith.constant 0 : i32
    return %arg0, %c0_i32 : i32, i32
  }
  func.func @transform_1(%arg0: i32) -> (i32, i32) {
    %c0_i32 = arith.constant 0 : i32
    %c0_i32_0 = arith.constant 0 : i32
    %c0_i32_1 = arith.constant 0 : i32
    return %c0_i32, %c0_i32_0 : i32, i32
  }
  func.func @transform_2(%arg0: i32) -> (i32, i32) {
    %c0_i32 = arith.constant 0 : i32
    %c0_i32_0 = arith.constant 0 : i32
    %c0_i32_1 = arith.constant 0 : i32
    return %c0_i32, %c0_i32_0 : i32, i32
  }
  func.func @transform_3(%arg0: i32) -> (i32, i32) {
    %c0_i32 = arith.constant 0 : i32
    %c0_i32_0 = arith.constant 0 : i32
    %c0_i32_1 = arith.constant 0 : i32
    return %c0_i32, %c0_i32_0 : i32, i32
  }
  func.func @transform_4(%arg0: i32) -> (i32, i32) {
    %c0_i32 = arith.constant 0 : i32
    %c0_i32_0 = arith.constant 0 : i32
    %c0_i32_1 = arith.constant 0 : i32
    return %c0_i32, %c0_i32_0 : i32, i32
  }
  func.func @transform_5(%arg0: i32) -> (i32, i32) {
    %c0_i32 = arith.constant 0 : i32
    %c0_i32_0 = arith.constant 0 : i32
    %c0_i32_1 = arith.constant 0 : i32
    return %c0_i32, %c0_i32_0 : i32, i32
  }
  func.func @transform_6(%arg0: i32) -> (i32, i32) {
    %c0_i32 = arith.constant 0 : i32
    %c0_i32_0 = arith.constant 0 : i32
    %c0_i32_1 = arith.constant 0 : i32
    return %c0_i32, %c0_i32_0 : i32, i32
  }
  func.func @transform_7(%arg0: i32) -> (i32, i32) {
    %c0_i32 = arith.constant 0 : i32
    %c0_i32_0 = arith.constant 0 : i32
    return %arg0, %c0_i32 : i32, i32
  }
}

</mosaic_0001>

<llo_original>
// kernel: tpu_custom_call.1
$region0: #{tpu_custom_call.1}
  #allocation0 [shape = 'u32[]', space=smem, size = 0x4, offset = 0x4, fixed_abs, tag = 'smem constant byte address 0x4 - core index']
  #allocation1 [shape = 'u32[144,128]{1,0:T(1,128)}', space=vmem, size = 0x12000, scoped, tag = 'internal scratch']
  #allocation2 [shape = 'f32[1,1]{1,0:T(1,128)S(1)}', space=vmem, size = 0x200, scoped, tag = 'scoped memory for tpu_custom_call.1']
  %s0 = inlined_call_operand.hbm [shape: f32[8,41], index: 0, kind: input, shape index: {}]
  %s1 = inlined_call_operand.hbm [shape: f32[41,160], index: 1, kind: input, shape index: {}]
  %s2 = inlined_call_operand.vmem [shape: f32[1,160], index: 2, kind: input, shape index: {}]
  %s3 = inlined_call_operand.vmem [shape: f32[1,160], index: 3, kind: input, shape index: {}]
  %s4 = inlined_call_operand.vmem [shape: f32[1,160], index: 4, kind: input, shape index: {}]
  %s5 = inlined_call_operand.vmem [shape: f32[1,160], index: 5, kind: input, shape index: {}]
  %s6 = inlined_call_operand.<no memory space> [shape: f32[1,1], index: 6, kind: input, shape index: {}]
  %s7 = inlined_call_operand.vmem [shape: f32[8,1], index: 7, kind: output, shape index: {}]
  %s8 = sld [smem:[#allocation0]]
  $region46: #{tpu_custom_call.1} parent=0
    _
  %s10 = ssub.s32 1, %s8
  %s11 = scalar_select 0, %s10, %s8
  %v12 = vstv %s6
  %13 = vst [vmem:[#allocation2] sm:$0x1] %v12
  $region1: #{tpu_custom_call.1} parent=0
    #allocation3 [shape = 'u8[4096]{0}', space=vmem, size = 0x1000, scoped, tag = 'input window, operand 0, single buffered']
    #allocation4 [shape = 's32[1]{0}', space=sflag, size = 0x4, scoped, tag = 'scoped memory for tpu_custom_call.1']
    #allocation5 [shape = 'u8[49152]{0}', space=vmem, size = 0xc000, scoped, tag = 'input window, operand 1, single buffered']
    #allocation6 [shape = 's32[1]{0}', space=sflag, size = 0x4, scoped, tag = 'scoped memory for tpu_custom_call.1']
    %14 = vsyncpa [#allocation4], 0
    %15 = vsyncpa [#allocation6], 0
    // Predicated region
    $region2: #{tpu_custom_call.1} parent=1 // pred_check
      _
    $region3: #{tpu_custom_call.1} parent=1 // pred_check_branch
      %17 = sbr.rel (0) target = $region5
    $region4: #{tpu_custom_call.1} parent=1 // pred_region
      %s19 = ssub.s32 128, 128
      %20 = vsyncadd [#allocation4], %s19
      %s22 = sshll.u32 [#allocation3], 4
      %s23 = int_to_ptr.vmem [resolvable:$true] %s22
      %25 = dma.hbm_to_vmem [thread:$0]  %s0, 128, %s23, [#allocation4]
    $region5: #{tpu_custom_call.1} parent=1 // pred_fallthru
      _
    // Predicated region
    $region6: #{tpu_custom_call.1} parent=1 // pred_check
      _
    $region7: #{tpu_custom_call.1} parent=1 // pred_check_branch
      %27 = sbr.rel (0) target = $region9
    $region8: #{tpu_custom_call.1} parent=1 // pred_region
      %s29 = ssub.s32 1536, 1536
      %30 = vsyncadd [#allocation6], %s29
      %s31 = sshll.u32 [#allocation5], 4
      %s32 = int_to_ptr.vmem [resolvable:$true] %s31
      %37 = dma.hbm_to_vmem [thread:$0]  %s1, 1536, %s32, [#allocation6], 256, 256, 16
    $region9: #{tpu_custom_call.1} parent=1 // pred_fallthru
      _
    // Predicated region
    $region10: #{tpu_custom_call.1} parent=1 // pred_check
      _
    $region11: #{tpu_custom_call.1} parent=1 // pred_check_branch
      %39 = sbr.rel (0) target = $region13
    $region12: #{tpu_custom_call.1} parent=1 // pred_region
      _
    $region13: #{tpu_custom_call.1} parent=1 // pred_fallthru
      _
    // Predicated region
    $region14: #{tpu_custom_call.1} parent=1 // pred_check
      _
    $region15: #{tpu_custom_call.1} parent=1 // pred_check_branch
      %41 = sbr.rel (0) target = $region17
    $region16: #{tpu_custom_call.1} parent=1 // pred_region
      _
    $region17: #{tpu_custom_call.1} parent=1 // pred_fallthru
      _
    // Predicated region
    $region18: #{tpu_custom_call.1} parent=1 // pred_check
      _
    $region19: #{tpu_custom_call.1} parent=1 // pred_check_branch
      %43 = sbr.rel (0) target = $region21
    $region20: #{tpu_custom_call.1} parent=1 // pred_region
      _
    $region21: #{tpu_custom_call.1} parent=1 // pred_fallthru
      _
    // Predicated region
    $region22: #{tpu_custom_call.1} parent=1 // pred_check
      _
    $region23: #{tpu_custom_call.1} parent=1 // pred_check_branch
      %45 = sbr.rel (0) target = $region25
    $region24: #{tpu_custom_call.1} parent=1 // pred_region
      _
    $region25: #{tpu_custom_call.1} parent=1 // pred_fallthru
      _
    // Predicated region
    $region26: #{tpu_custom_call.1} parent=1 // pred_check
      _
    $region27: #{tpu_custom_call.1} parent=1 // pred_check_branch
      %47 = sbr.rel (0) target = $region29
    $region28: #{tpu_custom_call.1} parent=1 // pred_region
      _
    $region29: #{tpu_custom_call.1} parent=1 // pred_fallthru
      _
    // Predicated region
    $region30: #{tpu_custom_call.1} parent=1 // pred_check
      _
    $region31: #{tpu_custom_call.1} parent=1 // pred_check_branch
      %49 = sbr.rel (0) target = $region33
    $region32: #{tpu_custom_call.1} parent=1 // pred_region
      %50 = dma.done [#allocation4], 128
    $region33: #{tpu_custom_call.1} parent=1 // pred_fallthru
      _
    // Predicated region
    $region34: #{tpu_custom_call.1} parent=1 // pred_check
      _
    $region35: #{tpu_custom_call.1} parent=1 // pred_check_branch
      %52 = sbr.rel (0) target = $region37
    $region36: #{tpu_custom_call.1} parent=1 // pred_region
      %53 = dma.done [#allocation6], 1536
    $region37: #{tpu_custom_call.1} parent=1 // pred_fallthru
      _
    %v54 = vld [vmem:[#allocation3] sm:$0xff]
    %v55 = vld [vmem:[#allocation5] sm:$0xff]
    %v56 = vld [vmem:[#allocation5 + $0x8] sm:$0xff]
    %v57 = vld [vmem:[#allocation5 + $0x10] sm:$0xff]
    %v58 = vld [vmem:[#allocation5 + $0x18] sm:$0xff]
    %v59 = vld [vmem:[#allocation5 + $0x20] sm:$0xff]
    %v60 = vld [vmem:[#allocation5 + $0x28] sm:$0xff]
    %v61 = vld [vmem:[#allocation5 + $0x30] sm:$0xff]
    %v62 = vld [vmem:[#allocation5 + $0x38] sm:$0xff]
    %v63 = vld [vmem:[#allocation5 + $0x40] sm:$0xff]
    %v64 = vld [vmem:[#allocation5 + $0x48] sm:$0xff]
    %v65 = vld [vmem:[#allocation5 + $0x50] sm:$0x1]
    %v66 = vld [vmem:[#allocation5 + $0x58] sm:$0x1]
    %v67 = vld [vmem:[%s2] sm:$0x3]
    %v69 = vlaneseq
    %v70 = vshrl.u32 %v69, 7
    %v71 = vsub.s32 0, %v70
    %v72 = vrot.slane %v67, %v71
    %v73 = vlaneseq
    %v74 = vshrl.u32 %v73, 7
    %v75 = vsub.s32 1, %v74
    %v76 = vrot.slane %v67, %v75
    %vm79 = vcmask 334848
    %v81 = vsel %vm79, %v54, 0
    %vm83 = vcmask 1040384
    %v85 = vsel %vm83, %v65, 0
    %v88 = vsel %vm83, %v66, 0
    %90 = vmatprep.subr.mxu0 %v56
    %91 = vmatpush1.msra.mxu0 %v55
    %92 = vmatprep.subr.mxu0 %v58
    %93 = vmatpush1.msra.mxu0 %v57
    %94 = vmatprep.subr.mxu0 %v60
    %95 = vmatpush1.msra.mxu0 %v59
    %96 = vmatprep.subr.mxu0 %v62
    %97 = vmatpush1.msra.mxu0 %v61
    %98 = vmatprep.subr.mxu0 %v64
    %99 = vmatpush1.msra.mxu0 %v63
    %100 = vmatprep.subr.mxu0 %v88
    %101 = vmatpush1.msra.mxu0 %v85
    %102 = vmatprep.subr.mxu0 0.0
    %103 = vmatpush1.msra.mxu0 0.0
    %104 = vmatprep.subr.mxu0 0.0
    %105 = vmatpush1.msra.mxu0 0.0
    %106 = vmatprep.subr.mxu0 0.0
    %107 = vmatpush1.msra.mxu0 0.0
    %108 = vmatprep.subr.mxu0 0.0
    %109 = vmatpush1.msra.mxu0 0.0
    %110 = vmatprep.subr.mxu0 0.0
    %111 = vmatpush1.msra.mxu0 0.0
    %112 = vmatprep.subr.mxu0 0.0
    %113 = vmatpush1.msra.mxu0 0.0
    %114 = vmatprep.subr.mxu0 0.0
    %115 = vmatpush1.msra.mxu0 0.0
    %116 = vmatprep.subr.mxu0 0.0
    %117 = vmatpush1.msra.mxu0 0.0
    %118 = vmatprep.subr.mxu0 0.0
    %119 = vmatpush1.msra.mxu0 0.0
    %120 = vmatprep.subr.mxu0 0.0
    %121 = vmatpush1.msra.mxu0 0.0
    %122 = vmatprep.subr.mxu0 0.0
    %123 = vmatpush1.msra.mxu0 0.0
    %124 = vmatprep.subr.mxu0 0.0
    %125 = vmatpush1.msra.mxu0 0.0
    %126 = vmatprep.subr.mxu0 0.0
    %127 = vmatpush1.msra.mxu0 0.0
    %128 = vmatprep.subr.mxu0 0.0
    %129 = vmatpush1.msra.mxu0 0.0
    %130 = vmatprep.subr.mxu0 0.0
    %131 = vmatpush1.msra.mxu0 0.0
    %132 = vmatprep.subr.mxu0 0.0
    %133 = vmatpush1.msra.mxu0 0.0
    %134 = vmatprep.subr.mxu0 0.0
    %135 = vmatpush1.msra.mxu0 0.0
    %136 = vmatprep.subr.mxu0 0.0
    %137 = vmatpush1.msra.mxu0 0.0
    %138 = vmatprep.subr.mxu0 0.0
    %139 = vmatpush1.msra.mxu0 0.0
    %140 = vmatprep.subr.mxu0 0.0
    %141 = vmatpush1.msra.mxu0 0.0
    %142 = vmatprep.subr.mxu0 0.0
    %143 = vmatpush1.msra.mxu0 0.0
    %144 = vmatprep.subr.mxu0 0.0
    %145 = vmatpush1.msra.mxu0 0.0
    %146 = vmatprep.subr.mxu0 0.0
    %147 = vmatpush1.msra.mxu0 0.0
    %148 = vmatprep.subr.mxu0 0.0
    %149 = vmatpush1.msra.mxu0 0.0
    %150 = vmatprep.subr.mxu0 0.0
    %151 = vmatpush1.msra.mxu0 0.0
    %152 = vmatprep.subr.mxu0 0.0
    %153 = vmatpush1.msra.mxu0 0.0
    %154 = vmatprep.mubr.f32.mxu0 0.0
    %155 = vmatmul.mubr.f32.gmra.mrb[0].mxu0 %v81
    %v156 = vpop.f32.mrb[0].mxu0
    %v157 = vadd.f32 %v72, %v156
    %v158 = vpop.f32.mrb[0].mxu0
    %v159 = vadd.f32 %v76, %v158
    %160 = vdwg.mxu0
    %vm161 = vcmask 261120
    %v162 = vsel %vm161, %v159, 0.0
    %v163 = vadd.f32 %v157, %v162
    %164 = vadd.xlane.f32.xlu0 %v163
    %v165 = vpop.xlane.xlu0 %164
    %v166 = vrcp.pop 160.0
    %v167 = vmul.f32 %v165, %v166
    %v168 = vsub.f32 %v157, %v167
    %v169 = vsub.f32 %v159, %v167
    %v170 = vmul.f32 %v168, %v168
    %v171 = vmul.f32 %v169, %v169
    %v172 = vsel %vm161, %v171, 0.0
    %v173 = vadd.f32 %v170, %v172
    %174 = vadd.xlane.f32.xlu0 %v173
    %v175 = vpop.xlane.xlu0 %174
    %v176 = vmul.f32 %v175, %v166
    %v177 = vadd.f32 %v176, 1e-05
    %v178 = vrsqrt.pop %v177
    %v179 = vmul.f32 %v168, %v178
    %v180 = vmul.f32 %v169, %v178
    %v181 = vld [vmem:[%s3] sm:$0x3]
    %v183 = vlaneseq
    %v184 = vshrl.u32 %v183, 7
    %v185 = vsub.s32 0, %v184
    %v186 = vrot.slane %v181, %v185
    %v187 = vlaneseq
    %v188 = vshrl.u32 %v187, 7
    %v189 = vsub.s32 1, %v188
    %v190 = vrot.slane %v181, %v189
    %v193 = vmul.f32 %v179, %v186
    %v194 = vmul.f32 %v180, %v190
    %v195 = vld [vmem:[%s4] sm:$0x3]
    %v197 = vlaneseq
    %v198 = vshrl.u32 %v197, 7
    %v199 = vsub.s32 0, %v198
    %v200 = vrot.slane %v195, %v199
    %v201 = vlaneseq
    %v202 = vshrl.u32 %v201, 7
    %v203 = vsub.s32 1, %v202
    %v204 = vrot.slane %v195, %v203
    %v207 = vadd.f32 %v193, %v200
    %v208 = vadd.f32 %v194, %v204
    %v209 = vmax.f32 %v207, 0.0
    %v210 = vmax.f32 %v208, 0.0
    %v211 = vld [vmem:[%s5] sm:$0x3]
    %v213 = vlaneseq
    %v214 = vshrl.u32 %v213, 7
    %v215 = vsub.s32 0, %v214
    %v216 = vrot.slane %v211, %v215
    %v217 = vlaneseq
    %v218 = vshrl.u32 %v217, 7
    %v219 = vsub.s32 1, %v218
    %v220 = vrot.slane %v211, %v219
    %v223 = vmul.f32 %v209, %v216
    %v224 = vmul.f32 %v210, %v220
    %v225 = vsel %vm161, %v224, 0.0
    %v226 = vadd.f32 %v223, %v225
    %227 = vadd.xlane.f32.xlu0 %v226
    %v228 = vpop.xlane.xlu0 %227
    %v229 = vld [vmem:[#allocation2] sm:$0x1]
    %v231 = vlaneseq
    %v232 = vshrl.u32 %v231, 7
    %v233 = vsub.s32 0, %v232
    %v234 = vrot.slane %v229, %v233
    %v236 = vadd.f32 %v228, %v234
    %vm237 = vcmask 7168
    %238 = vst.msk [vmem:[%s7] sm:$0xff] %vm237, %v236
    // Predicated region
    $region38: #{tpu_custom_call.1} parent=1 // pred_check
      _
    $region39: #{tpu_custom_call.1} parent=1 // pred_check_branch
      %240 = sbr.rel (0) target = $region41
    $region40: #{tpu_custom_call.1} parent=1 // pred_region
      _
    $region41: #{tpu_custom_call.1} parent=1 // pred_fallthru
      _
    // Predicated region
    $region42: #{tpu_custom_call.1} parent=1 // pred_check
      _
    $region43: #{tpu_custom_call.1} parent=1 // pred_check_branch
      %242 = sbr.rel (0) target = $region45
    $region44: #{tpu_custom_call.1} parent=1 // pred_region
      _
    $region45: #{tpu_custom_call.1} parent=1 // pred_fallthru
      _
    %243 = vsyncpa [#allocation4], 1
    %244 = vsyncpa [#allocation6], 1

</llo_original>
